<compile_context>
chip_gen: v7x
topology: tpu7x:2x2x1
jax: 0.10.0
libtpu: 0.0.40
codegen_flags: <defaults>
</compile_context>

<pallas_src>
import numpy as np
import jax
import jax.numpy as jnp
from jax.experimental import pallas as pl
from jax.experimental.pallas import tpu as pltpu

_LANES = 128


def _normalize_kernel(ab_ref, x_ref, o_ref):
    # y = a * x + b computed in float32 (matches PyTorch `x.float()`);
    # cast to the output dtype only on the store.
    ab = ab_ref[...].astype(jnp.float32)          # (2, W): row 0 = a, row 1 = b
    x = x_ref[...].astype(jnp.float32)            # (tb, W)
    o_ref[...] = (ab[0:1, :] * x + ab[1:2, :]).astype(o_ref.dtype)


def build_affine_params(normalize_cfg, num_features):
    """Replicates the PyTorch per-feature scale/offset construction loop."""
    a = np.zeros((num_features,), dtype=np.float32)
    b = np.zeros((num_features,), dtype=np.float32)
    prev_index = 0
    for x_min, x_max, u, l, length in zip(
        normalize_cfg["x_min"], normalize_cfg["x_max"],
        normalize_cfg["u"], normalize_cfg["l"], normalize_cfg["lengths"],
    ):
        # NOTE: like the PyTorch module, no guard against x_max == x_min.
        scale = (u - l) / (x_max - x_min)
        a[prev_index:prev_index + length] = scale
        b[prev_index:prev_index + length] = l - x_min * scale
        prev_index += length
    return jnp.asarray(a), jnp.asarray(b)


def _sublane_multiple(dtype):
    itemsize = jnp.dtype(dtype).itemsize
    return 8 if itemsize >= 4 else 8 * (4 // itemsize)   # f32:8, bf16:16, i8:32


def _pick_lane_width(total, F):
    """Lane-dense slab width, or None if the free-reshape path doesn't apply.

    Valid when F divides 128 (feature of flat position p is p % F, and F | W)
    and total % W == 0, so the reshape is a metadata op (no padding, no copy).
    """
    if F > _LANES or _LANES % F != 0:
        return None
    for W in (1024, 512, 256, _LANES):
        if total % W == 0:
            return W
    return None


def _generation_config():
    """Returns (combined in+out tile-byte target, vmem_limit_bytes or None)."""
    kind = ""
    try:
        kind = jax.devices()[0].device_kind.lower()
    except Exception:
        pass
    if "v7" in kind or "7x" in kind:
        # 3.2 TB/s HBM: amortize the ~0.35us/step overhead; 2x12 MiB of
        # double-buffers exceeds the 32 MiB default scoped limit (64 physical).
        return 12 << 20, 48 << 20
    if "v6" in kind:
        return 6 << 20, None          # comfortably under the 32 MiB default
    return 4 << 20, None              # v5e / unknown: inside 16 MiB default


def normalize_layer(x, a, b, *, out_dtype=jnp.float32, donate_input=False,
                    min_pallas_bytes=0):
    """y = a * x + b (per-feature affine) via a tiled, lane-dense Pallas kernel.

    x: [B, F] (any float dtype, streamed in its native dtype); a, b: [F].
    """
    B, F = x.shape
    out_dtype = jnp.dtype(out_dtype)

    # Tiny-input fast path (optional): launch + pipeline overhead dominates.
    if min_pallas_bytes and x.size * 4 < min_pallas_bytes:
        y = (a[None, :].astype(jnp.float32) * x.astype(jnp.float32)
             + b[None, :].astype(jnp.float32))
        return y.astype(out_dtype)

    total = B * F
    W = _pick_lane_width(total, F)
    if W is not None:
        # Lane-dense slab: free reshape of contiguous x; a/b tiled to width W.
        reps = W // F
        a_row = jnp.tile(a.astype(jnp.float32), reps)
        b_row = jnp.tile(b.astype(jnp.float32), reps)
        rows = total // W
        x2 = x.reshape(rows, W)
    else:
        # General path: full-extent feature blocks (block last dim == F), so
        # no padding of x and no post-kernel slice; Pallas handles the ragged
        # lane layout internally.
        W = F
        a_row = a.astype(jnp.float32)
        b_row = b.astype(jnp.float32)
        rows = B
        x2 = x
    ab = jnp.stack([a_row, b_row], axis=0)        # (2, W): one resident DMA

    in_item = jnp.dtype(x2.dtype).itemsize
    out_item = out_dtype.itemsize
    sub_mult = max(_sublane_multiple(x2.dtype), _sublane_multiple(out_dtype))

    target_bytes, vmem_limit = _generation_config()
    bytes_per_row = W * (in_item + out_item)
    tb = max(sub_mult, (target_bytes // bytes_per_row) // sub_mult * sub_mult)
    if tb >= rows:
        if rows > sub_mult:
            # Keep >= 2 grid steps so v7x can shard the row axis across 2 TCs.
            half = (rows + 1) // 2
            tb = min(rows, -(-half // sub_mult) * sub_mult)
        else:
            tb = rows                 # full-extent block (always legal)
    grid = (pl.cdiv(rows, tb),)

    cost = pl.CostEstimate(
        flops=2 * rows * W,
        transcendentals=0,
        bytes_accessed=rows * W * (in_item + out_item) + 2 * W * 4,
    )

    cp_kwargs = dict(dimension_semantics=(pltpu.PARALLEL,))
    if vmem_limit is not None:
        cp_kwargs["vmem_limit_bytes"] = vmem_limit

    extra = {}
    if donate_input and x2.dtype == out_dtype and x2.shape == (rows, W):
        extra["input_output_aliases"] = {1: 0}    # x2 backs the output buffer

    y2 = pl.pallas_call(
        _normalize_kernel,
        out_shape=jax.ShapeDtypeStruct((rows, W), out_dtype),
        grid_spec=pltpu.PrefetchScalarGridSpec(
            num_scalar_prefetch=0,
            grid=grid,
            in_specs=[
                pl.BlockSpec((2, W), lambda i: (0, 0)),     # a/b: resident
                pl.BlockSpec((tb, W), lambda i: (i, 0)),    # x: streamed
            ],
            out_specs=pl.BlockSpec((tb, W), lambda i: (i, 0)),
        ),
        compiler_params=pltpu.CompilerParams(**cp_kwargs),
        cost_estimate=cost,
        **extra,
    )(ab, x2)

    return y2.reshape(B, F)           # free reshape (no-op on general path)


if __name__ == "__main__":
    # Deterministic synthetic config: 3 feature segments of lengths 8, 16, 8.
    normalize_cfg = {
        "x_min": [0.0, -1.0, -2.0],
        "x_max": [1.0, 1.0, 2.0],
        "u": [1.0, 1.0, 1.0],
        "l": [-1.0, 0.0, -1.0],
        "lengths": [8, 16, 8],
    }
    F = sum(normalize_cfg["lengths"])  # 32
    a, b = build_affine_params(normalize_cfg, F)

    def ref(xx, aa, bb):
        return (aa[None, :].astype(jnp.float32) * xx.astype(jnp.float32)
                + bb[None, :].astype(jnp.float32))

    key = jax.random.PRNGKey(0)
    k1, k2, k3, k4 = jax.random.split(key, 4)

    # 1) Tiny general path (full-extent (2, 32) block).
    x_small = jax.random.normal(k1, (2, F), dtype=jnp.float32)
    y = jax.block_until_ready(normalize_layer(x_small, a, b))
    np.testing.assert_allclose(np.asarray(y), np.asarray(ref(x_small, a, b)),
                               rtol=1e-6, atol=1e-6)

    # 2) Lane-dense slab (W=1024), multi-step row grid, f32 input.
    x_ld = jax.random.normal(k2, (512, F), dtype=jnp.float32)
    y_ld = jax.block_until_ready(normalize_layer(x_ld, a, b))
    np.testing.assert_allclose(np.asarray(y_ld), np.asarray(ref(x_ld, a, b)),
                               rtol=1e-6, atol=1e-6)

    # 3) Native bf16 input (no wrapper cast), f32 output.
    x_bf = jax.random.normal(k3, (64, F), dtype=jnp.bfloat16)
    y_bf = jax.block_until_ready(normalize_layer(x_bf, a, b))
    np.testing.assert_allclose(np.asarray(y_bf), np.asarray(ref(x_bf, a, b)),
                               rtol=1e-6, atol=1e-5)

    # 4) General path: F=200 (neither a divisor nor multiple of 128), no pads.
    cfg2 = {
        "x_min": [0.0, -2.0],
        "x_max": [2.0, 2.0],
        "u": [1.0, 1.0],
        "l": [-1.0, 0.0],
        "lengths": [72, 128],
    }
    F2 = sum(cfg2["lengths"])  # 200
    a2, b2 = build_affine_params(cfg2, F2)
    x_g = jax.random.normal(k4, (16, F2), dtype=jnp.float32)
    y_g = jax.block_until_ready(normalize_layer(x_g, a2, b2))
    np.testing.assert_allclose(np.asarray(y_g), np.asarray(ref(x_g, a2, b2)),
                               rtol=1e-6, atol=1e-6)

    print("KERNEL_OK")
</pallas_src>

<mosaic_0001>
module attributes {stable_mosaic.version = 11 : i64} {
  func.func @_normalize_kernel(%arg0: i32, %arg1: memref<2x32xf32, #tpu.memory_space<vmem>>, %arg2: memref<2x32xf32, #tpu.memory_space<vmem>>, %arg3: memref<2x32xf32, #tpu.memory_space<vmem>>) attributes {dimension_semantics = [#tpu.dimension_semantics<parallel>], iteration_bounds = array<i64: 1>, scalar_prefetch = 0 : i64, scratch_operands = 0 : i64, tpu.core_type = #tpu.core_type<tc>, window_params = [{pipeline_mode = #tpu.pipeline_mode<synchronous>, transform_indices = @transform_0, window_bounds = array<i64: 2, 32>}, {transform_indices = @transform_1, window_bounds = array<i64: 2, 32>}, {transform_indices = @transform_2, window_bounds = array<i64: 2, 32>}]} {
    %c0 = arith.constant 0 : index
    %c0_0 = arith.constant 0 : index
    %0 = vector.load %arg1[%c0, %c0_0] : memref<2x32xf32, #tpu.memory_space<vmem>>, vector<2x32xf32>
    %c0_1 = arith.constant 0 : index
    %c0_2 = arith.constant 0 : index
    %1 = vector.load %arg2[%c0_1, %c0_2] : memref<2x32xf32, #tpu.memory_space<vmem>>, vector<2x32xf32>
    %2 = vector.extract_strided_slice %0 {offsets = [0, 0], sizes = [1, 32], strides = [1, 1]} : vector<2x32xf32> to vector<1x32xf32>
    %3 = vector.broadcast %2 : vector<1x32xf32> to vector<2x32xf32>
    %4 = arith.mulf %3, %1 : vector<2x32xf32>
    %5 = vector.extract_strided_slice %0 {offsets = [1, 0], sizes = [1, 32], strides = [1, 1]} : vector<2x32xf32> to vector<1x32xf32>
    %6 = vector.broadcast %5 : vector<1x32xf32> to vector<2x32xf32>
    %7 = arith.addf %4, %6 : vector<2x32xf32>
    %c0_3 = arith.constant 0 : index
    %c0_4 = arith.constant 0 : index
    %8 = vector.load %arg3[%c0_3, %c0_4] : memref<2x32xf32, #tpu.memory_space<vmem>>, vector<2x32xf32>
    tpu.vector_store %arg3[%c0_3, %c0_4], %7 {strides = array<i32>} : memref<2x32xf32, #tpu.memory_space<vmem>>, vector<2x32xf32>,
    return
  }
  func.func @transform_0(%arg0: i32) -> (i32, i32) {
    %c0_i32 = arith.constant 0 : i32
    %c0_i32_0 = arith.constant 0 : i32
    %c0_i32_1 = arith.constant 0 : i32
    return %c0_i32, %c0_i32_0 : i32, i32
  }
  func.func @transform_1(%arg0: i32) -> (i32, i32) {
    %c0_i32 = arith.constant 0 : i32
    %c0_i32_0 = arith.constant 0 : i32
    return %arg0, %c0_i32 : i32, i32
  }
  func.func @transform_2(%arg0: i32) -> (i32, i32) {
    %c0_i32 = arith.constant 0 : i32
    %c0_i32_0 = arith.constant 0 : i32
    return %arg0, %c0_i32 : i32, i32
  }
}

</mosaic_0001>

<llo_original>
// kernel: tpu_custom_call.1
$region0: #{tpu_custom_call.1}
  #allocation0 [shape = 'u32[]', space=smem, size = 0x4, offset = 0x4, fixed_abs, tag = 'smem constant byte address 0x4 - core index']
  #allocation1 [shape = 'u32[144,128]{1,0:T(1,128)}', space=vmem, size = 0x12000, scoped, tag = 'internal scratch']
  %s0 = inlined_call_operand.hbm [shape: f32[2,32], index: 0, kind: input, shape index: {}]
  %s1 = inlined_call_operand.vmem [shape: f32[2,32], index: 1, kind: input, shape index: {}]
  %s2 = inlined_call_operand.hbm [shape: f32[2,32], index: 2, kind: output, shape index: {}]
  %s3 = sld [smem:[#allocation0]]
  $region22: #{tpu_custom_call.1} parent=0
    _
  %s5 = ssub.s32 1, %s3
  %s6 = scalar_select 0, %s5, %s3
  $region1: #{tpu_custom_call.1} parent=0
    #allocation2 [shape = 'u8[1024]{0}', space=vmem, size = 0x400, scoped, tag = 'input window, operand 0, single buffered']
    #allocation3 [shape = 's32[1]{0}', space=sflag, size = 0x4, scoped, tag = 'scoped memory for tpu_custom_call.1']
    #allocation4 [shape = 's32[1]{0}', space=sflag, size = 0x4, scoped, tag = 'scoped memory for tpu_custom_call.1']
    #allocation5 [shape = 'u8[1024]{0}', space=vmem, size = 0x400, scoped, tag = 'output window, operand 0, single buffered']
    %7 = vsyncpa [#allocation3], 0
    %8 = vsyncpa [#allocation4], 0
    // Predicated region
    $region2: #{tpu_custom_call.1} parent=1 // pred_check
      _
    $region3: #{tpu_custom_call.1} parent=1 // pred_check_branch
      %10 = sbr.rel (0) target = $region5
    $region4: #{tpu_custom_call.1} parent=1 // pred_region
      %s12 = ssub.s32 32, 32
      %13 = vsyncadd [#allocation3], %s12
      %s15 = sshll.u32 [#allocation2], 4
      %s16 = int_to_ptr.vmem [resolvable:$true] %s15
      %18 = dma.hbm_to_vmem [thread:$0]  %s0, 32, %s16, [#allocation3]
    $region5: #{tpu_custom_call.1} parent=1 // pred_fallthru
      _
    // Predicated region
    $region6: #{tpu_custom_call.1} parent=1 // pred_check
      _
    $region7: #{tpu_custom_call.1} parent=1 // pred_check_branch
      %20 = sbr.rel (0) target = $region9
    $region8: #{tpu_custom_call.1} parent=1 // pred_region
      _
    $region9: #{tpu_custom_call.1} parent=1 // pred_fallthru
      _
    // Predicated region
    $region10: #{tpu_custom_call.1} parent=1 // pred_check
      _
    $region11: #{tpu_custom_call.1} parent=1 // pred_check_branch
      %22 = sbr.rel (0) target = $region13
    $region12: #{tpu_custom_call.1} parent=1 // pred_region
      %23 = dma.done [#allocation3], 32
    $region13: #{tpu_custom_call.1} parent=1 // pred_fallthru
      _
    %v24 = vld [vmem:[#allocation2] sm:$0x3]
    %v25 = vld [vmem:[%s1] sm:$0x3]
    %v26 = vlaneseq
    %v27 = vshrl.u32 %v26, 7
    %v28 = vsub.s32 0, %v27
    %v29 = vrot.slane %v24, %v28
    %v30 = vmul.f32 %v29, %v25
    %v31 = vlaneseq
    %v32 = vshrl.u32 %v31, 7
    %v33 = vsub.s32 1, %v32
    %v34 = vrot.slane %v24, %v33
    %v35 = vadd.f32 %v30, %v34
    %vm36 = vcmask 254976
    %37 = vst.msk [vmem:[#allocation5] sm:$0x3] %vm36, %v35
    // Predicated region
    $region14: #{tpu_custom_call.1} parent=1 // pred_check
      _
    $region15: #{tpu_custom_call.1} parent=1 // pred_check_branch
      %39 = sbr.rel (0) target = $region17
    $region16: #{tpu_custom_call.1} parent=1 // pred_region
      %s41 = ssub.s32 32, 32
      %42 = vsyncadd [#allocation4], %s41
      %s44 = sshll.u32 [#allocation5], 4
      %s45 = int_to_ptr.vmem [resolvable:$true] %s44
      %47 = dma.vmem_to_hbm [thread:$0]  %s45, 32, %s2, [#allocation4]
    $region17: #{tpu_custom_call.1} parent=1 // pred_fallthru
      _
    // Predicated region
    $region18: #{tpu_custom_call.1} parent=1 // pred_check
      _
    $region19: #{tpu_custom_call.1} parent=1 // pred_check_branch
      %49 = sbr.rel (0) target = $region21
    $region20: #{tpu_custom_call.1} parent=1 // pred_region
      %50 = dma.done [#allocation4], 32
    $region21: #{tpu_custom_call.1} parent=1 // pred_fallthru
      _
    %51 = vsyncpa [#allocation3], 1
    %52 = vsyncpa [#allocation4], 1

</llo_original>
